<compile_context>
chip_gen: v6e
topology: v6e:2x2x1
jax: 0.10.0
libtpu: 0.0.40
codegen_flags: <defaults>
</compile_context>

<pallas_src>
import functools

import jax
import jax.numpy as jnp
from jax.experimental import pallas as pl
from jax.experimental.pallas import tpu as pltpu


# ----------------------------------------------------------------------------
# helpers
# ----------------------------------------------------------------------------
def _round_up(x: int, m: int) -> int:
    return ((x + m - 1) // m) * m


def _pick_tile(dim: int, preferred: int, align: int) -> int:
    """Largest multiple of `align` <= `preferred` that divides `dim`, else the full dim
    (a full-extent block is always layout-legal)."""
    if dim <= preferred:
        return dim
    t = (preferred // align) * align
    while t >= align:
        if dim % t == 0:
            return t
        t -= align
    return dim


def _maybe_cast(x, dtype):
    if dtype is None or x.dtype == jnp.dtype(dtype):
        return x
    return x.astype(dtype)


def _vmem_capacity_bytes(default: int = 64 * 1024 * 1024) -> int:
    """Physical VMEM of the attached TPU; falls back to 64 MiB (v7x-safe)."""
    try:
        cap = int(pltpu.get_tpu_info().vmem_capacity_bytes)
        return cap if cap > 0 else default
    except Exception:
        return default


# ----------------------------------------------------------------------------
# Tiled batched linear kernel:  out[p] = x[p] @ w[p] + b[p]
#   x: (P, M, K), w: (P, K, N) (pre-transposed), b: (P, 1, N)
# ----------------------------------------------------------------------------
def _linear_kernel(x_ref, w_ref, b_ref, o_ref, acc_ref, *, mxu_dtype):
    @pl.when(pl.program_id(3) == 0)
    def _():
        acc_ref[...] = jnp.zeros_like(acc_ref)

    xb = _maybe_cast(x_ref[0], mxu_dtype)            # (tm, tk)
    wb = _maybe_cast(w_ref[0], mxu_dtype)            # (tk, tn) — pre-cast at init: no-op
    acc_ref[...] += jnp.dot(xb, wb, preferred_element_type=jnp.float32)

    @pl.when(pl.program_id(3) == pl.num_programs(3) - 1)
    def _():
        bias = b_ref[0].astype(jnp.float32)          # (1, tn) broadcasts over tm
        o_ref[0] = (acc_ref[...] + bias).astype(o_ref.dtype)


def pallas_linear(x, w, b, *, mxu_dtype=None, tm=512, tn=512, tk=2048):
    """x: (P, M, K); w: (P, K, N); b: (P, 1, N) -> (P, M, N)."""
    P, M, K = x.shape
    _, _, N = w.shape

    cap = _vmem_capacity_bytes()
    budget = int(cap * 0.70)

    x_isz = x.dtype.itemsize
    w_isz = w.dtype.itemsize
    o_isz = x.dtype.itemsize

    tm_eff = tn_eff = tk_eff = None
    est = 0
    for shrink in range(6):                          # shrink tiles until the block set fits
        tm_p = max(tm >> shrink, 128)
        tn_p = max(tn >> shrink, 128)
        tk_p = max(tk >> shrink, 256)
        tm_eff = M if M <= tm_p else tm_p            # big M -> 128-aligned tile, M gets padded
        tn_eff = _pick_tile(N, tn_p, 128)
        tk_eff = _pick_tile(K, tk_p, 128)
        est = (2 * (tm_eff * tk_eff * x_isz + tk_eff * tn_eff * w_isz + tn_eff * 4)
               + 2 * tm_eff * tn_eff * o_isz
               + tm_eff * tn_eff * 4)                # f32 accumulator scratch
        if est <= budget:
            break
    vmem_limit = int(min(max(est + (2 << 20), 32 << 20), cap))

    # Pad M so the M tile always divides (no masked stores, no full-extent blowups).
    M_pad = M if M <= tm_eff else _round_up(M, tm_eff)
    if M_pad != M:
        x = jnp.pad(x, ((0, 0), (0, M_pad - M), (0, 0)))

    kernel = functools.partial(_linear_kernel, mxu_dtype=mxu_dtype)
    out = pl.pallas_call(
        kernel,
        out_shape=jax.ShapeDtypeStruct((P, M_pad, N), x.dtype),
        grid=(P, M_pad // tm_eff, N // tn_eff, K // tk_eff),
        in_specs=[
            pl.BlockSpec((1, tm_eff, tk_eff), lambda p, i, j, kk: (p, i, kk)),
            pl.BlockSpec((1, tk_eff, tn_eff), lambda p, i, j, kk: (p, kk, j)),
            pl.BlockSpec((1, 1, tn_eff), lambda p, i, j, kk: (p, 0, j)),
        ],
        out_specs=pl.BlockSpec((1, tm_eff, tn_eff), lambda p, i, j, kk: (p, i, j)),
        scratch_shapes=[pltpu.VMEM((tm_eff, tn_eff), jnp.float32)],
        compiler_params=pltpu.CompilerParams(
            dimension_semantics=("parallel", "parallel", "parallel", "arbitrary"),
            vmem_limit_bytes=vmem_limit,
        ),
    )(x, w, b)
    return out[:, :M, :] if M_pad != M else out


# ----------------------------------------------------------------------------
# Attention kernel: one (batch, query-block) step processes every head and writes a
# lane-dense (tq, E) output block (heads folded) via a single f32 VMEM scratch.
# ----------------------------------------------------------------------------
def _mha_attention_kernel(*refs, heads, head_dim, mask_heads, has_mask,
                          mxu_dtype, exp_dtype, q_scale):
    if has_mask:
        q_ref, k_ref, v_ref, m_ref, o_ref, w_ref, acc_ref = refs
    else:
        q_ref, k_ref, v_ref, o_ref, w_ref, acc_ref = refs
        m_ref = None

    q = q_ref[0]                                     # (tq, E)
    k = k_ref[0]                                     # (L,  E)
    v = v_ref[0]                                     # (L,  E)

    if q_scale is not None:                          # class folds 1/sqrt(D) into W_q -> None
        q = q.astype(jnp.float32) * jnp.float32(q_scale)

    neg = jnp.float32(-1e20)
    bias_shared = None
    if has_mask and mask_heads == 1:
        # hoisted: computed once per grid step instead of once per head
        bias_shared = m_ref[0, 0].astype(jnp.float32) * neg          # (tq, L)

    D = head_dim
    for h in range(heads):                           # static unroll (H is small)
        sl = slice(h * D, (h + 1) * D)
        qh = _maybe_cast(q[:, sl], mxu_dtype)
        kh = _maybe_cast(k[:, sl], mxu_dtype)
        vh = _maybe_cast(v[:, sl], mxu_dtype)

        # Q @ K^T via dot_general contracting the last dims (no explicit transpose)
        scores = jax.lax.dot_general(
            qh, kh, (((1,), (1,)), ((), ())),
            preferred_element_type=jnp.float32)                      # (tq, L) f32

        if has_mask:
            bias = bias_shared if mask_heads == 1 else m_ref[0, h].astype(jnp.float32) * neg
            scores = scores + bias                   # PyTorch additive-mask semantics

        # numerically-stable softmax; exp in bf16 when the MXU path is bf16 (EUP-bound)
        smax = jnp.max(scores, axis=-1, keepdims=True)
        e = jnp.exp((scores - smax).astype(exp_dtype))               # (tq, L)
        e32 = e.astype(jnp.float32)
        denom = jnp.sum(e32, axis=-1, keepdims=True)                 # (tq, 1) f32
        inv = pl.reciprocal(denom, approx=False)     # exact: returned rows sum to 1
        w_ref[0, h] = (e32 * inv).astype(w_ref.dtype)

        # PV on the un-normalized exp; normalize on the small (tq, D) result
        pv = jnp.dot(_maybe_cast(e, mxu_dtype), vh,
                     preferred_element_type=jnp.float32)             # (tq, D)
        acc_ref[:, sl] = pv * inv

    # single lane-dense (tq, E) store (no per-head concat / relayout)
    o_ref[0] = acc_ref[...].astype(o_ref.dtype)


def pallas_attention(q, k, v, mask=None, *, heads, mxu_dtype=None, q_scale=None,
                     weights_dtype=None, tq_pref=512):
    """q/k/v: (B, L, E) (q already scaled by 1/sqrt(D) unless q_scale is given);
    mask: None or (1|B, 1|H, L, L) binary "is-masked" mask.
    Returns out (B, L, E) and weights (B, H, L, L)."""
    B, L, E = q.shape
    assert E % heads == 0
    D = E // heads

    has_mask = mask is not None
    if has_mask:
        mask = jnp.asarray(mask)
        if not jnp.issubdtype(mask.dtype, jnp.floating):
            mask = mask.astype(jnp.float32)
        if mask.ndim < 4:
            mask = mask.reshape((1,) * (4 - mask.ndim) + mask.shape)
        if mask.shape[2] != L or mask.shape[3] != L:
            mask = jnp.broadcast_to(mask, (mask.shape[0], mask.shape[1], L, L))
        Mb, Mh = mask.shape[0], mask.shape[1]
    else:
        Mb, Mh = 1, 1

    w_dtype = q.dtype if weights_dtype is None else weights_dtype
    exp_dtype = (jnp.bfloat16
                 if (mxu_dtype is not None and jnp.dtype(mxu_dtype) == jnp.dtype(jnp.bfloat16))
                 else jnp.float32)

    # ---- explicit VMEM budget -> tq (double-buffered blocks + f32 scratch) ----
    cap = _vmem_capacity_bytes()
    budget = int(cap * 0.70)
    kv_isz = k.dtype.itemsize
    q_isz = q.dtype.itemsize
    o_isz = q.dtype.itemsize
    w_isz = jnp.dtype(w_dtype).itemsize
    fixed = 4 * L * E * kv_isz                                   # K + V, 2 buffers each
    per_row = (2 * E * q_isz                                     # q block
               + 2 * E * o_isz                                   # out block
               + 2 * heads * L * w_isz                           # weights out block
               + E * 4)                                          # f32 acc scratch
    if has_mask:
        per_row += 2 * Mh * L * mask.dtype.itemsize              # mask block
    avail = max(budget - fixed, per_row * 8)
    tq_cap = max(int(avail // per_row), 8)
    tq = _pick_tile(L, min(tq_cap, tq_pref), 8)
    est = fixed + tq * per_row
    vmem_limit = int(min(max(est + (2 << 20), 32 << 20), cap))

    grid = (B, L // tq)

    in_specs = [
        pl.BlockSpec((1, tq, E), lambda b, i: (b, i, 0)),
        pl.BlockSpec((1, L, E), lambda b, i: (b, 0, 0)),
        pl.BlockSpec((1, L, E), lambda b, i: (b, 0, 0)),
    ]
    args = [q, k, v]
    if has_mask:
        if Mb == 1:   # broadcast over batch via the index_map (no HBM materialization)
            m_index = lambda b, i: (0, 0, i, 0)
        else:
            m_index = lambda b, i: (b, 0, i, 0)
        in_specs.append(pl.BlockSpec((1, Mh, tq, L), m_index))
        args.append(mask)

    kernel = functools.partial(
        _mha_attention_kernel, heads=heads, head_dim=D, mask_heads=Mh,
        has_mask=has_mask, mxu_dtype=mxu_dtype, exp_dtype=exp_dtype, q_scale=q_scale)

    return pl.pallas_call(
        kernel,
        out_shape=(
            jax.ShapeDtypeStruct((B, L, E), q.dtype),
            jax.ShapeDtypeStruct((B, heads, L, L), w_dtype),
        ),
        grid=grid,
        in_specs=in_specs,
        out_specs=(
            pl.BlockSpec((1, tq, E), lambda b, i: (b, i, 0)),
            pl.BlockSpec((1, heads, tq, L), lambda b, i: (b, 0, i, 0)),
        ),
        scratch_shapes=[pltpu.VMEM((tq, E), jnp.float32)],
        compiler_params=pltpu.CompilerParams(
            dimension_semantics=("parallel", "parallel"),
            vmem_limit_bytes=vmem_limit,
        ),
    )(*args)


# ----------------------------------------------------------------------------
# Module wrapper (mirrors the PyTorch MultiHeadAttention forward)
# ----------------------------------------------------------------------------
class MultiHeadAttentionPallas:
    def __init__(self, embedding_dim: int, heads: int, key, compute_dtype=None):
        assert embedding_dim % heads == 0
        self.embedding_dim = embedding_dim
        self.heads = heads
        self.head_samples = embedding_dim // heads
        self.compute_dtype = compute_dtype          # MXU operand dtype (None -> input dtype)

        E = embedding_dim
        D = self.head_samples
        keys = jax.random.split(key, 8)
        bound = 1.0 / (E ** 0.5)                    # mimics nn.Linear uniform init
        init_w = lambda kk: jax.random.uniform(kk, (E, E), jnp.float32, -bound, bound)
        init_b = lambda kk: jax.random.uniform(kk, (E,), jnp.float32, -bound, bound)
        wq, wk, wv, wo = (init_w(keys[i]) for i in range(4))     # stored as (in, out)
        bq, bk, bv, bo = (init_b(keys[i]) for i in range(4, 8))

        # raw f32 parameters, only for the pure-JAX reference
        self.ref_params = dict(wq=wq, wk=wk, wv=wv, wo=wo, bq=bq, bk=bk, bv=bv, bo=bo)

        # fold the 1/sqrt(D) attention scale into the Q projection (constant-folded once)
        scale = 1.0 / (D ** 0.5)
        wq_s, bq_s = wq * scale, bq * scale

        # pre-cast projection weights to the MXU dtype (halves weight HBM traffic and
        # removes the per-block in-kernel cast); biases stay f32 (added to f32 acc)
        pdt = jnp.float32 if compute_dtype is None else compute_dtype
        cw = lambda w: w.astype(pdt)

        self.w_qkv = jnp.stack([cw(wq_s), cw(wk), cw(wv)])                       # (3, E, E)
        self.b_qkv = jnp.stack([bq_s, bk, bv])[:, None, :]                       # (3, 1, E)
        self.w_qkv_cat = jnp.concatenate([cw(wq_s), cw(wk), cw(wv)], axis=1)[None]  # (1, E, 3E)
        self.b_qkv_cat = jnp.concatenate([bq_s, bk, bv])[None, None, :]          # (1, 1, 3E)
        self.w_out = cw(wo)[None]                                                # (1, E, E)
        self.b_out = bo[None, None, :]                                           # (1, 1, E)

    def __call__(self, q, k, v, mask=None):
        B, L, E = q.shape
        dt = self.compute_dtype

        if (q is k) and (q is v):
            # self-attention: one fused GEMM, weights concatenated along N (x read once)
            qkv = pallas_linear(q.reshape(1, B * L, E), self.w_qkv_cat,
                                self.b_qkv_cat, mxu_dtype=dt)         # (1, BL, 3E)
            qw = qkv[0, :, 0:E].reshape(B, L, E)
            kw = qkv[0, :, E:2 * E].reshape(B, L, E)
            vw = qkv[0, :, 2 * E:3 * E].reshape(B, L, E)
        else:
            # distinct q/k/v: single pallas_call batched over a leading size-3 grid axis
            x = jnp.stack([q.reshape(B * L, E), k.reshape(B * L, E),
                           v.reshape(B * L, E)], axis=0)              # (3, BL, E)
            qkv = pallas_linear(x, self.w_qkv, self.b_qkv, mxu_dtype=dt)
            qw = qkv[0].reshape(B, L, E)
            kw = qkv[1].reshape(B, L, E)
            vw = qkv[2].reshape(B, L, E)

        # attention output comes back in (B, L, E) with heads already folded;
        # 1/sqrt(D) is already folded into W_q, so no q_scale here.
        attn_out, attn_weights = pallas_attention(
            qw, kw, vw, mask, heads=self.heads, mxu_dtype=dt, q_scale=None)

        out = pallas_linear(attn_out.reshape(1, B * L, E), self.w_out, self.b_out,
                            mxu_dtype=dt)[0].reshape(B, L, E)
        return out, attn_weights


# ----------------------------------------------------------------------------
# Pure-JAX reference for correctness checks (uses raw, unscaled f32 parameters)
# ----------------------------------------------------------------------------
def reference_mha(mha, q, k, v, mask=None):
    p = mha.ref_params
    B, L, E = q.shape
    H, D = mha.heads, mha.head_samples
    qw = jnp.dot(q, p["wq"]) + p["bq"]
    kw = jnp.dot(k, p["wk"]) + p["bk"]
    vw = jnp.dot(v, p["wv"]) + p["bv"]
    split = lambda x: jnp.transpose(x.reshape(B, L, H, D), (0, 2, 1, 3))
    qh, kh, vh = split(qw), split(kw), split(vw)
    scores = jnp.einsum("bhqd,bhkd->bhqk", qh, kh) / jnp.sqrt(jnp.float32(D))
    if mask is not None:
        m = jnp.asarray(mask, jnp.float32)
        m = m.reshape((1,) * (4 - m.ndim) + m.shape)
        scores = scores + jnp.broadcast_to(m, scores.shape) * (-1e20)
    w = jax.nn.softmax(scores, axis=-1)
    out = jnp.einsum("bhqk,bhkd->bhqd", w, vh)
    out = jnp.transpose(out, (0, 2, 1, 3)).reshape(B, L, E)
    out = jnp.dot(out, p["wo"]) + p["bo"]
    return out, w


# ----------------------------------------------------------------------------
if __name__ == "__main__":
    key = jax.random.PRNGKey(0)
    k_param, k_q, k_k, k_v = jax.random.split(key, 4)

    batch, seq, embed, heads = 2, 8, 32, 4

    q = jax.random.normal(k_q, (batch, seq, embed), jnp.float32)
    k = jax.random.normal(k_k, (batch, seq, embed), jnp.float32)
    v = jax.random.normal(k_v, (batch, seq, embed), jnp.float32)

    # causal-style binary mask (1 = masked out), broadcast over batch/heads
    causal = (jnp.arange(seq)[:, None] < jnp.arange(seq)[None, :]).astype(jnp.float32)
    mask = causal.reshape(1, 1, seq, seq)

    # --- f32 path ---
    mha = MultiHeadAttentionPallas(embedding_dim=embed, heads=heads, key=k_param)
    out, weights = mha(q, k, v, mask)
    out = jax.block_until_ready(out)
    weights = jax.block_until_ready(weights)

    ref_out, ref_w = reference_mha(mha, q, k, v, mask)
    assert jnp.allclose(out, ref_out, atol=5e-3, rtol=5e-3), "output mismatch (f32)"
    assert jnp.allclose(weights, ref_w, atol=5e-3, rtol=5e-3), "weights mismatch (f32)"
    # exact-reciprocal normalization: returned attention rows sum to 1
    assert jnp.allclose(jnp.sum(weights, axis=-1), 1.0, atol=1e-4), "weights rows != 1"

    # --- no-mask path (mask BlockSpec + adds are skipped entirely) ---
    out_nm, w_nm = mha(q, k, v, None)
    ref_out_nm, ref_w_nm = reference_mha(mha, q, k, v, None)
    assert jnp.allclose(out_nm, ref_out_nm, atol=5e-3, rtol=5e-3), "output mismatch (no mask)"
    assert jnp.allclose(w_nm, ref_w_nm, atol=5e-3, rtol=5e-3), "weights mismatch (no mask)"

    # --- fused self-attention QKV path (q is k is v) ---
    out_sa, w_sa = mha(q, q, q, mask)
    ref_out_sa, ref_w_sa = reference_mha(mha, q, q, q, mask)
    assert jnp.allclose(out_sa, ref_out_sa, atol=5e-3, rtol=5e-3), "output mismatch (fused QKV)"
    assert jnp.allclose(w_sa, ref_w_sa, atol=5e-3, rtol=5e-3), "weights mismatch (fused QKV)"

    # --- bf16 MXU operands (pre-cast weights, bf16 exp), f32 accumulate ---
    mha_bf16 = MultiHeadAttentionPallas(embedding_dim=embed, heads=heads, key=k_param,
                                        compute_dtype=jnp.bfloat16)
    out_b, w_b = mha_bf16(q, k, v, mask)
    out_b = jax.block_until_ready(out_b)
    assert jnp.allclose(out_b, ref_out, atol=5e-2, rtol=5e-2), "output mismatch (bf16 MXU)"
    assert jnp.allclose(w_b, ref_w, atol=5e-2, rtol=5e-2), "weights mismatch (bf16 MXU)"

    print("KERNEL_OK")
</pallas_src>

<mosaic_0001>
module attributes {stable_mosaic.version = 11 : i64} {
  func.func @_linear_kernel(%arg0: i32, %arg1: i32, %arg2: i32, %arg3: i32, %arg4: memref<1x16x32xf32, #tpu.memory_space<vmem>>, %arg5: memref<1x32x32xf32, #tpu.memory_space<vmem>>, %arg6: memref<1x1x32xf32, #tpu.memory_space<vmem>>, %arg7: memref<1x16x32xf32, #tpu.memory_space<vmem>>, %arg8: memref<16x32xf32, #tpu.memory_space<vmem>>) attributes {dimension_semantics = [#tpu.dimension_semantics<parallel>, #tpu.dimension_semantics<parallel>, #tpu.dimension_semantics<parallel>, #tpu.dimension_semantics<arbitrary>], iteration_bounds = array<i64: 3, 1, 1, 1>, scalar_prefetch = 0 : i64, scratch_operands = 1 : i64, tpu.core_type = #tpu.core_type<tc>, window_params = [{transform_indices = @transform_0, window_bounds = array<i64: 1, 16, 32>}, {transform_indices = @transform_1, window_bounds = array<i64: 1, 32, 32>}, {transform_indices = @transform_2, window_bounds = array<i64: 1, 1, 32>}, {transform_indices = @transform_3, window_bounds = array<i64: 1, 16, 32>}]} {
    %c0_i32 = arith.constant 0 : i32
    %0 = arith.cmpi eq, %arg3, %c0_i32 : i32
    %1 = arith.extui %0 : i1 to i32
    %c0_i32_0 = arith.constant 0 : i32
    %2 = arith.cmpi ne, %1, %c0_i32_0 : i32
    scf.if %2 {
      %cst_12 = arith.constant 0.000000e+00 : f32
      %14 = vector.broadcast %cst_12 : f32 to vector<16x32xf32>
      %c0_13 = arith.constant 0 : index
      %c0_14 = arith.constant 0 : index
      %15 = vector.load %arg8[%c0_13, %c0_14] : memref<16x32xf32, #tpu.memory_space<vmem>>, vector<16x32xf32>
      tpu.vector_store %arg8[%c0_13, %c0_14], %14 {strides = array<i32>} : memref<16x32xf32, #tpu.memory_space<vmem>>, vector<16x32xf32>,
    } else {
    }
    %c0 = arith.constant 0 : index
    %c0_1 = arith.constant 0 : index
    %c0_2 = arith.constant 0 : index
    %3 = vector.load %arg4[%c0, %c0_1, %c0_2] : memref<1x16x32xf32, #tpu.memory_space<vmem>>, vector<1x16x32xf32>
    %4 = vector.shape_cast %3 : vector<1x16x32xf32> to vector<16x32xf32>
    %c0_3 = arith.constant 0 : index
    %c0_4 = arith.constant 0 : index
    %c0_5 = arith.constant 0 : index
    %5 = vector.load %arg5[%c0_3, %c0_4, %c0_5] : memref<1x32x32xf32, #tpu.memory_space<vmem>>, vector<1x32x32xf32>
    %6 = vector.shape_cast %5 : vector<1x32x32xf32> to vector<32x32xf32>
    %c0_6 = arith.constant 0 : index
    %c0_7 = arith.constant 0 : index
    %7 = vector.load %arg8[%c0_6, %c0_7] : memref<16x32xf32, #tpu.memory_space<vmem>>, vector<16x32xf32>
    %cst = arith.constant dense<0.000000e+00> : vector<16x32xf32>
    %8 = tpu.matmul %4, %6, %cst {dimension_numbers = #tpu.dot_dimension_numbers<[1], [0], [0], [1], [0, 0, 1, 1], [], []>} : vector<16x32xf32>, vector<32x32xf32>, vector<16x32xf32> -> vector<16x32xf32>
    %9 = arith.addf %7, %8 : vector<16x32xf32>
    %c0_8 = arith.constant 0 : index
    %c0_9 = arith.constant 0 : index
    %10 = vector.load %arg8[%c0_8, %c0_9] : memref<16x32xf32, #tpu.memory_space<vmem>>, vector<16x32xf32>
    tpu.vector_store %arg8[%c0_8, %c0_9], %9 {strides = array<i32>} : memref<16x32xf32, #tpu.memory_space<vmem>>, vector<16x32xf32>,
    %c0_i32_10 = arith.constant 0 : i32
    %11 = arith.cmpi eq, %arg3, %c0_i32_10 : i32
    %12 = arith.extui %11 : i1 to i32
    %c0_i32_11 = arith.constant 0 : i32
    %13 = arith.cmpi ne, %12, %c0_i32_11 : i32
    scf.if %13 {
      %c0_12 = arith.constant 0 : index
      %c0_13 = arith.constant 0 : index
      %c0_14 = arith.constant 0 : index
      %14 = vector.load %arg6[%c0_12, %c0_13, %c0_14] : memref<1x1x32xf32, #tpu.memory_space<vmem>>, vector<1x1x32xf32>
      %15 = vector.shape_cast %14 : vector<1x1x32xf32> to vector<1x32xf32>
      %c0_15 = arith.constant 0 : index
      %c0_16 = arith.constant 0 : index
      %16 = vector.load %arg8[%c0_15, %c0_16] : memref<16x32xf32, #tpu.memory_space<vmem>>, vector<16x32xf32>
      %17 = vector.broadcast %15 : vector<1x32xf32> to vector<16x32xf32>
      %18 = arith.addf %16, %17 : vector<16x32xf32>
      %c0_17 = arith.constant 0 : index
      %c0_18 = arith.constant 0 : index
      %c0_19 = arith.constant 0 : index
      %19 = vector.load %arg7[%c0_17, %c0_18, %c0_19] : memref<1x16x32xf32, #tpu.memory_space<vmem>>, vector<1x16x32xf32>
      %20 = vector.shape_cast %19 : vector<1x16x32xf32> to vector<16x32xf32>
      %21 = vector.shape_cast %18 : vector<16x32xf32> to vector<1x16x32xf32>
      tpu.vector_store %arg7[%c0_17, %c0_18, %c0_19], %21 {strides = array<i32>} : memref<1x16x32xf32, #tpu.memory_space<vmem>>, vector<1x16x32xf32>,
    } else {
    }
    return
  }
  func.func @transform_0(%arg0: i32, %arg1: i32, %arg2: i32, %arg3: i32) -> (i32, i32, i32) {
    %c0_i32 = arith.constant 0 : i32
    return %arg0, %arg1, %arg3 : i32, i32, i32
  }
  func.func @transform_1(%arg0: i32, %arg1: i32, %arg2: i32, %arg3: i32) -> (i32, i32, i32) {
    %c0_i32 = arith.constant 0 : i32
    return %arg0, %arg3, %arg2 : i32, i32, i32
  }
  func.func @transform_2(%arg0: i32, %arg1: i32, %arg2: i32, %arg3: i32) -> (i32, i32, i32) {
    %c0_i32 = arith.constant 0 : i32
    %c0_i32_0 = arith.constant 0 : i32
    return %arg0, %c0_i32, %arg2 : i32, i32, i32
  }
  func.func @transform_3(%arg0: i32, %arg1: i32, %arg2: i32, %arg3: i32) -> (i32, i32, i32) {
    %c0_i32 = arith.constant 0 : i32
    return %arg0, %arg1, %arg2 : i32, i32, i32
  }
}

</mosaic_0001>

<llo_original>
// kernel: tpu_custom_call.1
$region0: #{tpu_custom_call.1}
  #allocation0 [shape = 'u32[]', space=smem, size = 0x4, offset = 0x4, fixed_abs, tag = 'smem constant byte address 0x4 - core index']
  #allocation1 [shape = 'u32[144,128]{1,0:T(1,128)}', space=vmem, size = 0x12000, scoped, tag = 'internal scratch']
  #allocation2 [shape = 'f32[16,32]{1,0:T(8,128)}', space=vmem, size = 0x2000, scoped, tag = 'scratch operand']
  %s0 = inlined_call_operand.hbm [shape: f32[3,16,32], index: 0, kind: input, shape index: {}]
  %s1 = inlined_call_operand.hbm [shape: f32[3,32,32], index: 1, kind: input, shape index: {}]
  %s2 = inlined_call_operand.vmem [shape: f32[3,1,32], index: 2, kind: input, shape index: {}]
  %s3 = inlined_call_operand.hbm [shape: f32[3,16,32], index: 3, kind: output, shape index: {}]
  %s4 = sld [smem:[#allocation0]]
  $region61: #{tpu_custom_call.1} parent=0
    _
  %s6 = ssub.s32 1, %s4
  %s7 = scalar_select 0, %s6, %s4
  $region1: #{tpu_custom_call.1} parent=0
    #allocation3 [shape = 'u8[16384]{0}', space=vmem, size = 0x4000, scoped, tag = 'input window, operand 0']
    #allocation4 [shape = 's32[2]{0}', space=sflag, size = 0x8, scoped, tag = 'scoped memory for tpu_custom_call.1']
    #allocation5 [shape = 's32[2]{0}', space=sflag, size = 0x8, scoped, tag = 'scoped memory for tpu_custom_call.1']
    #allocation6 [shape = 'u8[32768]{0}', space=vmem, size = 0x8000, scoped, tag = 'input window, operand 1']
    #allocation7 [shape = 's32[2]{0}', space=sflag, size = 0x8, scoped, tag = 'scoped memory for tpu_custom_call.1']
    #allocation8 [shape = 'u8[16384]{0}', space=vmem, size = 0x4000, scoped, tag = 'output window, operand 0']
    %8 = vsyncpa [#allocation4], 0
    %s9 = scalar_lea.sflag [#allocation4], 1
    %10 = vsyncpa %s9, 0
    %11 = vsyncpa [#allocation7], 0
    %s12 = scalar_lea.sflag [#allocation7], 1
    %13 = vsyncpa %s12, 0
    %14 = vsyncpa [#allocation5], 0
    %s15 = scalar_lea.sflag [#allocation5], 1
    %16 = vsyncpa %s15, 0
    loop: start=0, step=1, limit=5
    $region2: #{tpu_custom_call.1} parent=1 // loop_pre_header
      _
    $region3: #{tpu_custom_call.1} parent=1 // loop_header
      %s18 = sphi 0, %s22
      %p19 = scmp.ge.s32.totalorder %s18, 5
      %s25 = sphi 0, %s51
      %s26 = sphi 0, %s47
      %s27 = sphi 0, %s43
      %s28 = sphi 0, %s39
      %s29 = sphi 0, %s25
      %s30 = sphi 0, %s26
      %s31 = sphi 0, %s27
      %s32 = sphi 0, %s28
      %s33 = sphi 0, %s29
      %s34 = sphi 0, %s30
      %s35 = sphi 0, %s31
      %s36 = sphi 0, %s32
      %s58 = sphi 0, %s60
      %s61 = sphi 0, %s58
      %s62 = sphi 0, %s61
      %s78 = sphi 0, %s62
      %s88 = sphi 0, %s90
      %s91 = sphi 0, %s88
      %s92 = sphi 0, %s91
      %s108 = sphi 0, %s92
      %s116 = sphi 0, %s118
      %s119 = sphi 0, %s116
      %s120 = sphi 0, %s119
      %s136 = sphi 0, %s120
      %s146 = sphi 0, %s148
      %s149 = sphi 0, %s146
      %s150 = sphi 0, %s149
      %s166 = sphi 0, %s150
    $region4: #{tpu_custom_call.1} parent=1 // loop_header_branch
      %21 = sbr.rel (%p19) target = $region8
    $region5: #{tpu_custom_call.1} parent=1 // loop_body
      %s23 = ssub.s32 %s18, 1
      %s24 = ssub.s32 %s18, 2
      %s37 = sadd.s32 1, %s28
      %p38 = scmp.ge.s32.totalorder %s37, 1
      %s39 = scalar_select %p38, 0, %s37
      %s40 = sadd.s32 1, %s27
      %s41 = scalar_select %p38, %s40, %s27
      %p42 = scmp.ge.s32.totalorder %s41, 1
      %s43 = scalar_select %p42, 0, %s41
      %s44 = sadd.s32 1, %s26
      %s45 = scalar_select %p42, %s44, %s26
      %p46 = scmp.ge.s32.totalorder %s45, 1
      %s47 = scalar_select %p46, 0, %s45
      %s48 = sadd.s32 1, %s25
      %s49 = scalar_select %p46, %s48, %s25
      %p50 = scmp.ge.s32.totalorder %s49, 3
      %s51 = scalar_select %p50, 0, %s49
      %s52 = ssub.s32 %s25, %s51
      %s53 = ssub.s32 %s26, %s47
      %s54 = sor.u32 %s52, %s53
      %s55 = ssub.s32 %s28, %s39
      %s56 = sor.u32 %s54, %s55
      %p57 = scmp.eq.s32.totalorder %s56, 0
      %s59 = sadd.s32 %s58, 1
      %s60 = scalar_select %p57, %s58, %s59
      %p63 = pneg %p57
      %p64 = scmp.eq.s32.totalorder %s18, 2
      %p65 = por %p63, %p64
      %p66 = scmp.ne.s32.totalorder %s58, %s61
      %p67 = scmp.eq.s32.totalorder %s18, 0
      %p68 = por %p66, %p67
      %p69 = scmp.ne.s32.totalorder %s58, %s61
      %p70 = scmp.eq.s32.totalorder %s23, 2
      %p71 = por %p69, %p70
      %p72 = scmp.ne.s32.totalorder %s61, %s62
      %p73 = scmp.eq.s32.totalorder %s23, 0
      %p74 = por %p72, %p73
      %p75 = scmp.ne.s32.totalorder %s61, %s62
      %p76 = scmp.eq.s32.totalorder %s24, 2
      %p77 = por %p75, %p76
      %p79 = scmp.ne.s32.totalorder %s62, %s78
      %p80 = scmp.eq.s32.totalorder %s24, 0
      %p81 = por %p79, %p80
      %s82 = ssub.s32 %s25, %s51
      %s83 = ssub.s32 %s28, %s39
      %s84 = sor.u32 %s82, %s83
      %s85 = ssub.s32 %s27, %s43
      %s86 = sor.u32 %s84, %s85
      %p87 = scmp.eq.s32.totalorder %s86, 0
      %s89 = sadd.s32 %s88, 1
      %s90 = scalar_select %p87, %s88, %s89
      %p93 = pneg %p87
      %p94 = scmp.eq.s32.totalorder %s18, 2
      %p95 = por %p93, %p94
      %p96 = scmp.ne.s32.totalorder %s88, %s91
      %p97 = scmp.eq.s32.totalorder %s18, 0
      %p98 = por %p96, %p97
      %p99 = scmp.ne.s32.totalorder %s88, %s91
      %p100 = scmp.eq.s32.totalorder %s23, 2
      %p101 = por %p99, %p100
      %p102 = scmp.ne.s32.totalorder %s91, %s92
      %p103 = scmp.eq.s32.totalorder %s23, 0
      %p104 = por %p102, %p103
      %p105 = scmp.ne.s32.totalorder %s91, %s92
      %p106 = scmp.eq.s32.totalorder %s24, 2
      %p107 = por %p105, %p106
      %p109 = scmp.ne.s32.totalorder %s92, %s108
      %p110 = scmp.eq.s32.totalorder %s24, 0
      %p111 = por %p109, %p110
      %s112 = ssub.s32 %s25, %s51
      %s113 = ssub.s32 %s27, %s43
      %s114 = sor.u32 %s112, %s113
      %p115 = scmp.eq.s32.totalorder %s114, 0
      %s117 = sadd.s32 %s116, 1
      %s118 = scalar_select %p115, %s116, %s117
      %p121 = pneg %p115
      %p122 = scmp.eq.s32.totalorder %s18, 2
      %p123 = por %p121, %p122
      %p124 = scmp.ne.s32.totalorder %s116, %s119
      %p125 = scmp.eq.s32.totalorder %s18, 0
      %p126 = por %p124, %p125
      %p127 = scmp.ne.s32.totalorder %s116, %s119
      %p128 = scmp.eq.s32.totalorder %s23, 2
      %p129 = por %p127, %p128
      %p130 = scmp.ne.s32.totalorder %s119, %s120
      %p131 = scmp.eq.s32.totalorder %s23, 0
      %p132 = por %p130, %p131
      %p133 = scmp.ne.s32.totalorder %s119, %s120
      %p134 = scmp.eq.s32.totalorder %s24, 2
      %p135 = por %p133, %p134
      %p137 = scmp.ne.s32.totalorder %s120, %s136
      %p138 = scmp.eq.s32.totalorder %s24, 0
      %p139 = por %p137, %p138
      %s140 = ssub.s32 %s25, %s51
      %s141 = ssub.s32 %s26, %s47
      %s142 = sor.u32 %s140, %s141
      %s143 = ssub.s32 %s27, %s43
      %s144 = sor.u32 %s142, %s143
      %p145 = scmp.eq.s32.totalorder %s144, 0
      %s147 = sadd.s32 %s146, 1
      %s148 = scalar_select %p145, %s146, %s147
      %p151 = pneg %p145
      %p152 = scmp.eq.s32.totalorder %s18, 2
      %p153 = por %p151, %p152
      %p154 = scmp.ne.s32.totalorder %s146, %s149
      %p155 = scmp.eq.s32.totalorder %s18, 0
      %p156 = por %p154, %p155
      %p157 = scmp.ne.s32.totalorder %s146, %s149
      %p158 = scmp.eq.s32.totalorder %s23, 2
      %p159 = por %p157, %p158
      %p160 = scmp.ne.s32.totalorder %s149, %s150
      %p161 = scmp.eq.s32.totalorder %s23, 0
      %p162 = por %p160, %p161
      %p163 = scmp.ne.s32.totalorder %s149, %s150
      %p164 = scmp.eq.s32.totalorder %s24, 2
      %p165 = por %p163, %p164
      %p167 = scmp.ne.s32.totalorder %s150, %s166
      %p168 = scmp.eq.s32.totalorder %s24, 0
      %p169 = por %p167, %p168
      %p170 = scmp.le.s32.totalorder 1, %s18
      %p171 = scmp.lt.s32.totalorder %s18, 4
      %p172 = pnand %p170, %p171
      %p173 = pneg %p172
      // Predicated region
      $region9: #{tpu_custom_call.1} parent=5 // pred_check
        _
      $region10: #{tpu_custom_call.1} parent=5 // pred_check_branch
        %175 = sbr.rel (%p172) target = $region12
      $region11: #{tpu_custom_call.1} parent=5 // pred_region
        %s176 = ssub.s32 %s18, 1
      $region12: #{tpu_custom_call.1} parent=5 // pred_fallthru
        _
      %p177 = scmp.lt.s32.totalorder %s18, 3
      // Predicated region
      $region13: #{tpu_custom_call.1} parent=5 // pred_check
        %p178 = pneg %p177
      $region14: #{tpu_custom_call.1} parent=5 // pred_check_branch
        %180 = sbr.rel (%p178) target = $region16
      $region15: #{tpu_custom_call.1} parent=5 // pred_region
        // Predicated region
        $region17: #{tpu_custom_call.1} parent=15 // pred_check
          %p181 = pneg %p68
        $region18: #{tpu_custom_call.1} parent=15 // pred_check_branch
          %183 = sbr.rel (%p181) target = $region20
        $region19: #{tpu_custom_call.1} parent=15 // pred_region
          %s184 = sand.u32 %s58, 1
          %s185 = scalar_lea.sflag [#allocation4], %s184
          %s186 = sand.u32 %s58, 1
          %s187 = smul.addr %s186, 16
          %s188 = scalar_lea.vmem [#allocation3], %s187
          %s189 = smul.u32 2, %s26
          %s191 = ssub.s32 256, 256
          %192 = vsyncadd %s185, %s191
          %s193 = sadd.s32 %s28, %s189
          %s194 = smul.addr %s25, 2
          %s195 = sadd.s32 %s193, %s194
          %s196 = smul.addr %s195, 128
          %s197 = scalar_lea.hbm %s0, %s196
          %s198 = sshll.u32 %s188, 4
          %s199 = int_to_ptr.vmem [resolvable:$true] %s198
          %204 = dma.hbm_to_vmem [thread:$0]  %s197, 256, %s199, %s185, 128, 128, 8
        $region20: #{tpu_custom_call.1} parent=15 // pred_fallthru
          _
        // Predicated region
        $region21: #{tpu_custom_call.1} parent=15 // pred_check
          %p205 = pneg %p98
        $region22: #{tpu_custom_call.1} parent=15 // pred_check_branch
          %207 = sbr.rel (%p205) target = $region24
        $region23: #{tpu_custom_call.1} parent=15 // pred_region
          %s208 = sand.u32 %s88, 1
          %s209 = scalar_lea.sflag [#allocation7], %s208
          %s210 = sand.u32 %s88, 1
          %s211 = smul.addr %s210, 32
          %s212 = scalar_lea.vmem [#allocation6], %s211
          %s213 = smul.u32 4, %s28
          %s215 = ssub.s32 512, 512
          %216 = vsyncadd %s209, %s215
          %s217 = sadd.s32 %s27, %s213
          %s218 = smul.addr %s25, 4
          %s219 = sadd.s32 %s217, %s218
          %s220 = smul.addr %s219, 128
          %s221 = scalar_lea.hbm %s1, %s220
          %s222 = sshll.u32 %s212, 4
          %s223 = int_to_ptr.vmem [resolvable:$true] %s222
          %228 = dma.hbm_to_vmem [thread:$0]  %s221, 512, %s223, %s209, 128, 128, 8
        $region24: #{tpu_custom_call.1} parent=15 // pred_fallthru
          _
        // Predicated region
        $region25: #{tpu_custom_call.1} parent=15 // pred_check
          %p229 = pneg %p126
        $region26: #{tpu_custom_call.1} parent=15 // pred_check_branch
          %231 = sbr.rel (%p229) target = $region28
        $region27: #{tpu_custom_call.1} parent=15 // pred_region
          %p232 = scmp.lt.s32.totalorder %s25, 2
          %s233 = scalar_select %p232, %s25, 2
          %p234 = scmp.lt.s32.totalorder %s27, 0
          %s235 = scalar_select %p234, %s27, 0
          %s236 = sadd.s32 %s235, %s233
          %s237 = scalar_lea.vmem %s2, %s236
        $region28: #{tpu_custom_call.1} parent=15 // pred_fallthru
          _
      $region16: #{tpu_custom_call.1} parent=5 // pred_fallthru
        _
      %p238 = scmp.le.s32.totalorder 1, %s18
      %p239 = scmp.lt.s32.totalorder %s18, 4
      %p240 = pnand %p238, %p239
      %p241 = pneg %p240
      // Predicated region
      $region29: #{tpu_custom_call.1} parent=5 // pred_check
        _
      $region30: #{tpu_custom_call.1} parent=5 // pred_check_branch
        %243 = sbr.rel (%p240) target = $region32
      $region31: #{tpu_custom_call.1} parent=5 // pred_region
        %s244 = ssub.s32 %s18, 1
        %s245 = sand.u32 %s61, 1
        %s246 = scalar_lea.sflag [#allocation4], %s245
        %s247 = sand.u32 %s61, 1
        %s248 = smul.addr %s247, 16
        %s249 = scalar_lea.vmem [#allocation3], %s248
        // Predicated region
        $region33: #{tpu_custom_call.1} parent=31 // pred_check
          %p250 = pneg %p74
        $region34: #{tpu_custom_call.1} parent=31 // pred_check_branch
          %252 = sbr.rel (%p250) target = $region36
        $region35: #{tpu_custom_call.1} parent=31 // pred_region
          %253 = dma.done %s246, 256
        $region36: #{tpu_custom_call.1} parent=31 // pred_fallthru
          _
        %s254 = sand.u32 %s91, 1
        %s255 = scalar_lea.sflag [#allocation7], %s254
        %s256 = sand.u32 %s91, 1
        %s257 = smul.addr %s256, 32
        %s258 = scalar_lea.vmem [#allocation6], %s257
        // Predicated region
        $region37: #{tpu_custom_call.1} parent=31 // pred_check
          %p259 = pneg %p104
        $region38: #{tpu_custom_call.1} parent=31 // pred_check_branch
          %261 = sbr.rel (%p259) target = $region40
        $region39: #{tpu_custom_call.1} parent=31 // pred_region
          %262 = dma.done %s255, 512
        $region40: #{tpu_custom_call.1} parent=31 // pred_fallthru
          _
        %s263 = sand.u32 %s61, 1
        %s264 = scalar_lea.sflag [#allocation4], %s263
        %s265 = sand.u32 %s61, 1
        %s266 = smul.addr %s265, 16
        %s267 = scalar_lea.vmem [#allocation3], %s266
        %p268 = pneg %p74
        %p269 = pneg %p71
        %s270 = sand.u32 %s91, 1
        %s271 = scalar_lea.sflag [#allocation7], %s270
        %s272 = sand.u32 %s91, 1
        %s273 = smul.addr %s272, 32
        %s274 = scalar_lea.vmem [#allocation6], %s273
        %p275 = pneg %p104
        %p276 = pneg %p101
        %p277 = scmp.lt.s32.totalorder %s29, 2
        %s278 = scalar_select %p277, %s29, 2
        %p279 = scmp.lt.s32.totalorder %s31, 0
        %s280 = scalar_select %p279, %s31, 0
        %s281 = sadd.s32 %s280, %s278
        %s282 = scalar_lea.vmem %s2, %s281
        %p283 = pneg %p132
        %p284 = pneg %p129
        %p285 = pneg %p162
        %p286 = pneg %p159
        %s287 = sand.u32 %s149, 1
        %s288 = scalar_lea.sflag [#allocation5], %s287
        %s289 = sand.u32 %s149, 1
        %s290 = smul.addr %s289, 16
        %s291 = scalar_lea.vmem [#allocation8], %s290
        %s292 = smul.u32 2, %s30
        %s293 = smul.u32 4, %s32
        %p294 = scmp.lt.s32.totalorder %s29, 2
        %s295 = scalar_select %p294, %s29, 2
        %p296 = scmp.lt.s32.totalorder %s31, 0
        %s297 = scalar_select %p296, %s31, 0
        %s298 = sadd.s32 %s297, %s295
        %s299 = scalar_lea.vmem %s2, %s298
        %s300 = smul.u32 2, %s30
        %p301 = scmp.eq.s32.totalorder %s32, 0
        // Predicated region
        $region41: #{tpu_custom_call.1} parent=31 // pred_check
          %p302 = pneg %p301
        $region42: #{tpu_custom_call.1} parent=31 // pred_check_branch
          %304 = sbr.rel (%p302) target = $region44
        $region43: #{tpu_custom_call.1} parent=31 // pred_region
          %vm305 = vcmask 261120
          %306 = vst.msk [vmem:[#allocation2] sm:$0xff] %vm305, 0.0
          %307 = vst.msk [vmem:[#allocation2 + $0x8] sm:$0xff] %vm305, 0.0
        $region44: #{tpu_custom_call.1} parent=31 // pred_fallthru
          _
        %v308 = vld [vmem:[%s249] sm:$0xff]
        %v309 = vld [vmem:[%s249 + $0x8] sm:$0xff]
        %v310 = vld [vmem:[%s258] sm:$0xff]
        %v311 = vld [vmem:[%s258 + $0x8] sm:$0xff]
        %v312 = vld [vmem:[%s258 + $0x10] sm:$0xff]
        %v313 = vld [vmem:[%s258 + $0x18] sm:$0xff]
        %v314 = vld [vmem:[#allocation2] sm:$0xff]
        %v315 = vld [vmem:[#allocation2 + $0x8] sm:$0xff]
        %vm316 = vcmask 261120
        %v318 = vsel %vm316, %v308, 0
        %v321 = vsel %vm316, %v309, 0
        %323 = vmatprep.subr.mxu0 0.0
        %324 = vmatpush1.msra.mxu0 0.0
        %325 = vmatprep.subr.mxu0 0.0
        %326 = vmatpush1.msra.mxu0 0.0
        %327 = vmatprep.subr.mxu0 0.0
        %328 = vmatpush1.msra.mxu0 0.0
        %329 = vmatprep.subr.mxu0 0.0
        %330 = vmatpush1.msra.mxu0 0.0
        %331 = vmatprep.subr.mxu0 0.0
        %332 = vmatpush1.msra.mxu0 0.0
        %333 = vmatprep.subr.mxu0 0.0
        %334 = vmatpush1.msra.mxu0 0.0
        %335 = vmatprep.subr.mxu0 0.0
        %336 = vmatpush1.msra.mxu0 0.0
        %337 = vmatprep.subr.mxu0 0.0
        %338 = vmatpush1.msra.mxu0 0.0
        %339 = vmatprep.subr.mxu0 0.0
        %340 = vmatpush1.msra.mxu0 0.0
        %341 = vmatprep.subr.mxu0 0.0
        %342 = vmatpush1.msra.mxu0 0.0
        %343 = vmatprep.subr.mxu0 0.0
        %344 = vmatpush1.msra.mxu0 0.0
        %345 = vmatprep.subr.mxu0 0.0
        %346 = vmatpush1.msra.mxu0 0.0
        %347 = vmatprep.subr.mxu0 0.0
        %348 = vmatpush1.msra.mxu0 %v313
        %349 = vmatprep.subr.mxu0 0.0
        %350 = vmatpush1.msra.mxu0 %v312
        %351 = vmatprep.subr.mxu0 0.0
        %352 = vmatpush1.msra.mxu0 %v311
        %353 = vmatprep.subr.mxu0 0.0
        %354 = vmatpush1.msra.mxu0 %v310
        %355 = vmatprep.subr.mxu0 0.0
        %356 = vmatpush2.msra.mxu0 0.0
        %357 = vmatprep.subr.mxu0 0.0
        %358 = vmatpush2.msra.mxu0 0.0
        %359 = vmatprep.subr.mxu0 0.0
        %360 = vmatpush2.msra.mxu0 0.0
        %361 = vmatprep.subr.mxu0 0.0
        %362 = vmatpush2.msra.mxu0 0.0
        %363 = vmatprep.subr.mxu0 0.0
        %364 = vmatpush2.msra.mxu0 0.0
        %365 = vmatprep.subr.mxu0 0.0
        %366 = vmatpush2.msra.mxu0 0.0
        %367 = vmatprep.subr.mxu0 0.0
        %368 = vmatpush2.msra.mxu0 0.0
        %369 = vmatprep.subr.mxu0 0.0
        %370 = vmatpush2.msra.mxu0 0.0
        %371 = vmatprep.subr.mxu0 0.0
        %372 = vmatpush2.msra.mxu0 0.0
        %373 = vmatprep.subr.mxu0 0.0
        %374 = vmatpush2.msra.mxu0 0.0
        %375 = vmatprep.subr.mxu0 0.0
        %376 = vmatpush2.msra.mxu0 0.0
        %377 = vmatprep.subr.mxu0 0.0
        %378 = vmatpush2.msra.mxu0 0.0
        %379 = vmatprep.subr.mxu0 0.0
        %380 = vmatpush2.msra.mxu0 0.0
        %381 = vmatprep.subr.mxu0 0.0
        %382 = vmatpush2.msra.mxu0 0.0
        %383 = vmatprep.subr.mxu0 0.0
        %384 = vmatpush2.msra.mxu0 0.0
        %385 = vmatprep.subr.mxu0 0.0
        %386 = vmatpush2.msra.mxu0 0.0
        %387 = vmatprep.mubr.f32.mxu0 0.0
        %388 = vmatmul.mubr.f32.gmra.mxu0 %v318
        %v389 = vpop.f32.mrf.mxu0
        %v390 = vadd.f32 0.0, %v389
        %v391 = vpop.f32.mrf.mxu0
        %392 = vmatprep.mubr.f32.mxu0 0.0
        %393 = vmatmul.mubr.f32.gmra.mxu0 %v321
        %v394 = vpop.f32.mrf.mxu0
        %v395 = vadd.f32 0.0, %v394
        %v396 = vpop.f32.mrf.mxu0
        %397 = vdwg.mxu0
        %v398 = vadd.f32 %v314, %v390
        %v399 = vadd.f32 %v315, %v395
        %400 = vst.msk [vmem:[#allocation2] sm:$0xff] %vm316, %v398
        %401 = vst.msk [vmem:[#allocation2 + $0x8] sm:$0xff] %vm316, %v399
        // Predicated region
        $region45: #{tpu_custom_call.1} parent=31 // pred_check
          %p402 = pneg %p301
        $region46: #{tpu_custom_call.1} parent=31 // pred_check_branch
          %404 = sbr.rel (%p402) target = $region48
        $region47: #{tpu_custom_call.1} parent=31 // pred_region
          %v405 = vld [vmem:[%s299] sm:$0x1]
          %v406 = vld [vmem:[#allocation2] sm:$0xff]
          %v407 = vld [vmem:[#allocation2 + $0x8] sm:$0xff]
          %v409 = vlaneseq
          %v410 = vshrl.u32 %v409, 7
          %v411 = vsub.s32 0, %v410
          %v412 = vrot.slane %v405, %v411
          %v414 = vadd.f32 %v406, %v412
          %v415 = vadd.f32 %v407, %v412
          %416 = vst.msk [vmem:[%s291] sm:$0xff] %vm316, %v414
          %417 = vst.msk [vmem:[%s291 + $0x8] sm:$0xff] %vm316, %v415
        $region48: #{tpu_custom_call.1} parent=31 // pred_fallthru
          _
        %s418 = sand.u32 %s149, 1
        %s419 = scalar_lea.sflag [#allocation5], %s418
        %s420 = sand.u32 %s149, 1
        %s421 = smul.addr %s420, 16
        %s422 = scalar_lea.vmem [#allocation8], %s421
        // Predicated region
        $region49: #{tpu_custom_call.1} parent=31 // pred_check
          %p423 = pneg %p159
        $region50: #{tpu_custom_call.1} parent=31 // pred_check_branch
          %425 = sbr.rel (%p423) target = $region52
        $region51: #{tpu_custom_call.1} parent=31 // pred_region
          %s426 = smul.u32 2, %s30
          %s428 = ssub.s32 256, 256
          %429 = vsyncadd %s419, %s428
          %s430 = sadd.s32 %s31, %s426
          %s431 = smul.addr %s29, 2
          %s432 = sadd.s32 %s430, %s431
          %s433 = smul.addr %s432, 128
          %s434 = scalar_lea.hbm %s3, %s433
          %s435 = sshll.u32 %s422, 4
          %s436 = int_to_ptr.vmem [resolvable:$true] %s435
          %441 = dma.vmem_to_hbm [thread:$0]  %s436, 256, %s434, %s419, 128, 128, 8
        $region52: #{tpu_custom_call.1} parent=31 // pred_fallthru
          _
      $region32: #{tpu_custom_call.1} parent=5 // pred_fallthru
        _
      %p442 = scmp.le.s32.totalorder 2, %s18
      // Predicated region
      $region53: #{tpu_custom_call.1} parent=5 // pred_check
        %p443 = pneg %p442
      $region54: #{tpu_custom_call.1} parent=5 // pred_check_branch
        %445 = sbr.rel (%p443) target = $region56
      $region55: #{tpu_custom_call.1} parent=5 // pred_region
        %s446 = ssub.s32 %s18, 2
        // Predicated region
        $region57: #{tpu_custom_call.1} parent=55 // pred_check
          %p447 = pneg %p165
        $region58: #{tpu_custom_call.1} parent=55 // pred_check_branch
          %449 = sbr.rel (%p447) target = $region60
        $region59: #{tpu_custom_call.1} parent=55 // pred_region
          %s450 = sand.u32 %s150, 1
          %s451 = scalar_lea.sflag [#allocation5], %s450
          %s452 = sand.u32 %s150, 1
          %s453 = smul.addr %s452, 16
          %s454 = scalar_lea.vmem [#allocation8], %s453
          %455 = dma.done %s451, 256
        $region60: #{tpu_custom_call.1} parent=55 // pred_fallthru
          _
      $region56: #{tpu_custom_call.1} parent=5 // pred_fallthru
        _
    $region6: #{tpu_custom_call.1} parent=1 // loop_footer
      %s22 = sadd.s32 1, %s18
    $region7: #{tpu_custom_call.1} parent=1 // loop_footer_branch
      %17 = sbr.rel target = $region3
    $region8: #{tpu_custom_call.1} parent=1 // loop_exit
      _
    %456 = vsyncpa [#allocation4], 1
    %s457 = scalar_lea.sflag [#allocation4], 1
    %458 = vsyncpa %s457, 1
    %459 = vsyncpa [#allocation7], 1
    %s460 = scalar_lea.sflag [#allocation7], 1
    %461 = vsyncpa %s460, 1
    %462 = vsyncpa [#allocation5], 1
    %s463 = scalar_lea.sflag [#allocation5], 1
    %464 = vsyncpa %s463, 1

</llo_original>
